<compile_context>
chip_gen: v7x
topology: tpu7x:2x2x1
jax: 0.10.0
libtpu: 0.0.40
codegen_flags: <defaults>
</compile_context>

<pallas_src>
import jax
import jax.numpy as jnp
from jax.experimental import pallas as pl
from jax.experimental.pallas import tpu as pltpu


def _round_up(x, m):
    return (x + m - 1) // m * m


def _cdiv(a, b):
    return (a + b - 1) // b


# --------------------------------------------------------------------------
# Pallas kernel: fused gather (as multi-hot MXU matmul) + 2-layer MLP + value
# head, all with the batch on the lane axis.
# --------------------------------------------------------------------------
def _critic_kernel(idx_ref, tab_ref, w2t_ref, b2_ref, w3_ref, o_ref):
    # idx_ref : [S+1, tb] int32  row indices into the folded table (batch on lanes)
    # tab_ref : [Hp, Rp]  f32    folded (embedding @ W1 + b1) table, transposed, resident
    # w2t_ref : [Hp, Hp]  f32    W2^T, resident
    # b2_ref  : [Hp, 1]   f32    resident
    # w3_ref  : [Hp, 1]   f32    resident
    # o_ref   : [1, tb]   f32    lane-dense per-row values
    idx = idx_ref[...]                                    # [S+1, tb]
    n_idx, tb = idx.shape
    rp = tab_ref.shape[1]

    # Multi-hot gather matrix.  Row-space of the folded table is partitioned
    # per observation slot, so rows never collide across slots.
    row_iota = jax.lax.broadcasted_iota(jnp.int32, (rp, tb), 0)
    onehot = (row_iota == idx[0:1, :]).astype(jnp.float32)
    for s in range(1, n_idx):
        onehot = onehot + (row_iota == idx[s:s + 1, :]).astype(jnp.float32)

    # Layer 1: the gather + bias is one MXU matmul (b1 already folded in).
    h1 = jnp.maximum(
        jnp.dot(tab_ref[...], onehot, preferred_element_type=jnp.float32), 0.0)

    # Layer 2.
    h2 = jnp.maximum(
        jnp.dot(w2t_ref[...], h1, preferred_element_type=jnp.float32)
        + b2_ref[...], 0.0)

    # Value head: sublane reduction against w3 -> lane-dense [1, tb] row.
    v = jnp.sum(h2 * w3_ref[...], axis=0, keepdims=True)
    o_ref[...] = v.astype(o_ref.dtype)


def _critic_pallas(idx_t, tab_t, w2_t, b2_col, w3_col, *, tb):
    n_idx, bp = idx_t.shape
    hp, rp = tab_t.shape
    nb = bp // tb

    flops = bp * (2 * rp * hp + 2 * hp * hp + 5 * rp + 6 * hp)
    bytes_accessed = 4 * (idx_t.size + tab_t.size + w2_t.size
                          + b2_col.size + w3_col.size + bp)

    return pl.pallas_call(
        _critic_kernel,
        out_shape=jax.ShapeDtypeStruct((1, bp), jnp.float32),
        grid_spec=pltpu.PrefetchScalarGridSpec(
            num_scalar_prefetch=0,
            grid=(nb,),
            in_specs=[
                pl.BlockSpec((n_idx, tb), lambda i: (0, i)),  # batch-tiled indices
                pl.BlockSpec((hp, rp), lambda i: (0, 0)),     # folded table^T (resident)
                pl.BlockSpec((hp, hp), lambda i: (0, 0)),     # W2^T (resident)
                pl.BlockSpec((hp, 1), lambda i: (0, 0)),      # b2 column (resident)
                pl.BlockSpec((hp, 1), lambda i: (0, 0)),      # w3 column (resident)
            ],
            out_specs=pl.BlockSpec((1, tb), lambda i: (0, i)),
        ),
        compiler_params=pltpu.CompilerParams(
            dimension_semantics=("parallel",),
        ),
        cost_estimate=pl.CostEstimate(
            flops=flops, transcendentals=0, bytes_accessed=bytes_accessed),
    )(idx_t, tab_t, w2_t, b2_col, w3_col)


# --------------------------------------------------------------------------
# Parameter construction (deterministic, synthetic — no checkpoint load)
# --------------------------------------------------------------------------
def init_params(key, *, node_num, defender_num, node_embed_dim, time_embed_dim,
                max_time_horizon, hidden_dim):
    ks = jax.random.split(key, 8)
    d_in = node_embed_dim * (defender_num + 1) + time_embed_dim

    def dense_w(k, fan_in, fan_out):
        scale = 1.0 / jnp.sqrt(jnp.float32(fan_in))
        return jax.random.uniform(k, (fan_in, fan_out), jnp.float32, -scale, scale)

    def dense_b(k, fan_in, fan_out):
        scale = 1.0 / jnp.sqrt(jnp.float32(fan_in))
        return jax.random.uniform(k, (1, fan_out), jnp.float32, -scale, scale)

    return {
        # +1 node slot (padding / "not on graph") as in the reference code
        "node_emb": jax.random.normal(ks[0], (node_num + 1, node_embed_dim),
                                      jnp.float32) * 0.1,
        "time_emb": jax.random.normal(ks[1], (max_time_horizon, time_embed_dim),
                                      jnp.float32) * 0.1,
        "w1": dense_w(ks[2], d_in, hidden_dim),
        "b1": dense_b(ks[5], d_in, hidden_dim),
        "w2": dense_w(ks[3], hidden_dim, hidden_dim),
        "b2": dense_b(ks[6], hidden_dim, hidden_dim),
        "w3": dense_w(ks[4], hidden_dim, 1),
        "b3": dense_b(ks[7], hidden_dim, 1),
    }


# --------------------------------------------------------------------------
# Forward: H_Critic_With_Emb_Layer_Scratch.forward(hgs, T, cent_obs, batch)
# --------------------------------------------------------------------------
def h_critic_forward(params, hgs, T, cent_obs, batch=True):
    # TODO(synk): `hgs` (the hypergraph) is unused in the "Scratch" variant —
    # embeddings are learned from scratch via the embedding tables below.
    del hgs, batch
    cent_obs = cent_obs.astype(jnp.int32)            # [B, defender_num + 1]
    T = T.astype(jnp.int32).reshape(-1)              # [B]

    node_emb = params["node_emb"]                    # [N+1, E_n]
    time_emb = params["time_emb"]                    # [T_max, E_t]
    w1, b1 = params["w1"], params["b1"]
    w2, b2 = params["w2"], params["b2"]
    w3, b3 = params["w3"], params["b3"]

    B, n_slots = cent_obs.shape
    node_vocab, e_n = node_emb.shape
    h = w1.shape[1]
    hp = _round_up(h, 128)                           # lane-dense hidden dim

    # ---- Fold embedding lookup + first matmul (+ b1) into one small table --
    w1_nodes = w1[: n_slots * e_n].reshape(n_slots, e_n, h)        # [S, E_n, H]
    node_tables = jnp.einsum("ne,seh->snh", node_emb, w1_nodes)    # [S, N+1, H]
    node_tables = node_tables.reshape(n_slots * node_vocab, h)
    time_table = time_emb @ w1[n_slots * e_n:] + b1                # [T_max, H]
    combined = jnp.concatenate([node_tables, time_table], axis=0)  # [R, H]
    r = combined.shape[0]
    rp = _round_up(r, 128)

    tab_t = jnp.pad(combined.astype(jnp.float32),
                    ((0, rp - r), (0, hp - h))).T                  # [Hp, Rp]
    w2_t = jnp.pad(w2, ((0, hp - h), (0, hp - h))).T               # [Hp, Hp]
    b2_col = jnp.pad(b2, ((0, 0), (0, hp - h))).reshape(hp, 1)     # [Hp, 1]
    w3_col = jnp.pad(w3, ((0, hp - h), (0, 0)))                    # [Hp, 1]

    # ---- Row indices into the folded table (per-slot offsets keep rows
    #      disjoint across slots) ---------------------------------------------
    slot_off = (jnp.arange(n_slots, dtype=jnp.int32) * node_vocab)[None, :]
    idx = jnp.concatenate(
        [cent_obs + slot_off, (T + n_slots * node_vocab)[:, None]], axis=1)

    # ---- Batch tiling: batch lives on the lane axis (multiples of 128);
    #      >= 2 grid steps once B > 128 (v7x 2-TC sharding); tile cap 1024. ---
    bp128 = _round_up(max(B, 1), 128)
    nb_target = max(1 if bp128 <= 128 else 2, _cdiv(bp128, 1024))
    tb = _round_up(_cdiv(bp128, nb_target), 128)
    bp = _round_up(B, tb)

    idx_t = jnp.pad(idx.T, ((0, 0), (0, bp - B)))                  # [S+1, bp]

    # ---- Hot path: fully fused gather + MLP kernel ---------------------------
    vals = _critic_pallas(idx_t, tab_t, w2_t, b2_col, w3_col, tb=tb)  # [1, bp]
    return vals[0, :B].reshape(B, 1) + b3


# --------------------------------------------------------------------------
# Pure-JAX reference (original, un-fused math) for a correctness check
# --------------------------------------------------------------------------
def _ref_forward(params, hgs, T, cent_obs):
    cent_obs = cent_obs.astype(jnp.int32)
    T = T.astype(jnp.int32).reshape(-1)
    B = cent_obs.shape[0]
    node_e = jnp.take(params["node_emb"], cent_obs, axis=0).reshape(B, -1)
    time_e = jnp.take(params["time_emb"], T, axis=0)
    x = jnp.concatenate([node_e, time_e], axis=-1).astype(jnp.float32)
    h1 = jnp.maximum(x @ params["w1"] + params["b1"], 0.0)
    h2 = jnp.maximum(h1 @ params["w2"] + params["b2"], 0.0)
    return h2 @ params["w3"] + params["b3"]


# --------------------------------------------------------------------------
if __name__ == "__main__":
    # Small synthetic "args"
    node_num = 16
    defender_num = 3
    node_embed_dim = 8
    time_embed_dim = 4
    max_time_horizon = 10
    hypernet_hidden_dim = 32
    batch_size = 2

    key = jax.random.PRNGKey(0)
    k_param, k_obs, k_t, k_hgs = jax.random.split(key, 4)

    params = init_params(
        k_param,
        node_num=node_num,
        defender_num=defender_num,
        node_embed_dim=node_embed_dim,
        time_embed_dim=time_embed_dim,
        max_time_horizon=max_time_horizon,
        hidden_dim=hypernet_hidden_dim,
    )

    # cent_obs: node indices of (defenders + attacker); T: current time step;
    # hgs: a stand-in graph adjacency (unused by the Scratch critic).
    cent_obs = jax.random.randint(k_obs, (batch_size, defender_num + 1),
                                  0, node_num + 1, dtype=jnp.int32)
    T = jax.random.randint(k_t, (batch_size,), 0, max_time_horizon,
                           dtype=jnp.int32)
    hgs = jax.random.normal(k_hgs, (batch_size, node_num, node_num),
                            jnp.float32)

    values = h_critic_forward(params, hgs, T, cent_obs, batch=True)
    values = jax.block_until_ready(values)

    ref = _ref_forward(params, hgs, T, cent_obs)
    assert values.shape == (batch_size, 1)
    assert jnp.allclose(values, ref, atol=1e-4, rtol=1e-4), (
        f"max abs err = {jnp.max(jnp.abs(values - ref))}")

    print("KERNEL_OK")
</pallas_src>

<mosaic_0001>
module attributes {stable_mosaic.version = 11 : i64} {
  func.func @_critic_kernel(%arg0: i32, %arg1: memref<5x128xi32, #tpu.memory_space<vmem>>, %arg2: memref<128x128xf32, #tpu.memory_space<vmem>>, %arg3: memref<128x128xf32, #tpu.memory_space<vmem>>, %arg4: memref<128x1xf32, #tpu.memory_space<vmem>>, %arg5: memref<128x1xf32, #tpu.memory_space<vmem>>, %arg6: memref<1x128xf32, #tpu.memory_space<vmem>>) attributes {dimension_semantics = [#tpu.dimension_semantics<parallel>], iteration_bounds = array<i64: 1>, scalar_prefetch = 0 : i64, scratch_operands = 0 : i64, tpu.core_type = #tpu.core_type<tc>, window_params = [{transform_indices = @transform_0, window_bounds = array<i64: 5, 128>}, {pipeline_mode = #tpu.pipeline_mode<synchronous>, transform_indices = @transform_1, window_bounds = array<i64: 128, 128>}, {pipeline_mode = #tpu.pipeline_mode<synchronous>, transform_indices = @transform_2, window_bounds = array<i64: 128, 128>}, {pipeline_mode = #tpu.pipeline_mode<synchronous>, transform_indices = @transform_3, window_bounds = array<i64: 128, 1>}, {pipeline_mode = #tpu.pipeline_mode<synchronous>, transform_indices = @transform_4, window_bounds = array<i64: 128, 1>}, {transform_indices = @transform_5, window_bounds = array<i64: 1, 128>}]} {
    %c0 = arith.constant 0 : index
    %c0_0 = arith.constant 0 : index
    %0 = vector.load %arg1[%c0, %c0_0] : memref<5x128xi32, #tpu.memory_space<vmem>>, vector<5x128xi32>
    %1 = tpu.iota {dimensions = array<i32: 0>} : vector<128x128xi32>
    %2 = vector.extract_strided_slice %0 {offsets = [0, 0], sizes = [1, 128], strides = [1, 1]} : vector<5x128xi32> to vector<1x128xi32>
    %3 = vector.broadcast %2 : vector<1x128xi32> to vector<128x128xi32>
    %4 = arith.cmpi eq, %1, %3 : vector<128x128xi32>
    %5 = arith.extui %4 : vector<128x128xi1> to vector<128x128xi32>
    %6 = arith.sitofp %5 : vector<128x128xi32> to vector<128x128xf32>
    %7 = vector.extract_strided_slice %0 {offsets = [1, 0], sizes = [1, 128], strides = [1, 1]} : vector<5x128xi32> to vector<1x128xi32>
    %8 = vector.broadcast %7 : vector<1x128xi32> to vector<128x128xi32>
    %9 = arith.cmpi eq, %1, %8 : vector<128x128xi32>
    %10 = arith.extui %9 : vector<128x128xi1> to vector<128x128xi32>
    %11 = arith.sitofp %10 : vector<128x128xi32> to vector<128x128xf32>
    %12 = arith.addf %6, %11 : vector<128x128xf32>
    %13 = vector.extract_strided_slice %0 {offsets = [2, 0], sizes = [1, 128], strides = [1, 1]} : vector<5x128xi32> to vector<1x128xi32>
    %14 = vector.broadcast %13 : vector<1x128xi32> to vector<128x128xi32>
    %15 = arith.cmpi eq, %1, %14 : vector<128x128xi32>
    %16 = arith.extui %15 : vector<128x128xi1> to vector<128x128xi32>
    %17 = arith.sitofp %16 : vector<128x128xi32> to vector<128x128xf32>
    %18 = arith.addf %12, %17 : vector<128x128xf32>
    %19 = vector.extract_strided_slice %0 {offsets = [3, 0], sizes = [1, 128], strides = [1, 1]} : vector<5x128xi32> to vector<1x128xi32>
    %20 = vector.broadcast %19 : vector<1x128xi32> to vector<128x128xi32>
    %21 = arith.cmpi eq, %1, %20 : vector<128x128xi32>
    %22 = arith.extui %21 : vector<128x128xi1> to vector<128x128xi32>
    %23 = arith.sitofp %22 : vector<128x128xi32> to vector<128x128xf32>
    %24 = arith.addf %18, %23 : vector<128x128xf32>
    %25 = vector.extract_strided_slice %0 {offsets = [4, 0], sizes = [1, 128], strides = [1, 1]} : vector<5x128xi32> to vector<1x128xi32>
    %26 = vector.broadcast %25 : vector<1x128xi32> to vector<128x128xi32>
    %27 = arith.cmpi eq, %1, %26 : vector<128x128xi32>
    %28 = arith.extui %27 : vector<128x128xi1> to vector<128x128xi32>
    %29 = arith.sitofp %28 : vector<128x128xi32> to vector<128x128xf32>
    %30 = arith.addf %24, %29 : vector<128x128xf32>
    %c0_1 = arith.constant 0 : index
    %c0_2 = arith.constant 0 : index
    %31 = vector.load %arg2[%c0_1, %c0_2] : memref<128x128xf32, #tpu.memory_space<vmem>>, vector<128x128xf32>
    %cst = arith.constant dense<0.000000e+00> : vector<128x128xf32>
    %32 = tpu.matmul %31, %30, %cst {dimension_numbers = #tpu.dot_dimension_numbers<[1], [0], [0], [1], [0, 0, 1, 1], [], []>} : vector<128x128xf32>, vector<128x128xf32>, vector<128x128xf32> -> vector<128x128xf32>
    %cst_3 = arith.constant 0.000000e+00 : f32
    %33 = vector.broadcast %cst_3 : f32 to vector<128x128xf32>
    %34 = arith.maximumf %32, %33 : vector<128x128xf32>
    %c0_4 = arith.constant 0 : index
    %c0_5 = arith.constant 0 : index
    %35 = vector.load %arg3[%c0_4, %c0_5] : memref<128x128xf32, #tpu.memory_space<vmem>>, vector<128x128xf32>
    %cst_6 = arith.constant dense<0.000000e+00> : vector<128x128xf32>
    %36 = tpu.matmul %35, %34, %cst_6 {dimension_numbers = #tpu.dot_dimension_numbers<[1], [0], [0], [1], [0, 0, 1, 1], [], []>} : vector<128x128xf32>, vector<128x128xf32>, vector<128x128xf32> -> vector<128x128xf32>
    %c0_7 = arith.constant 0 : index
    %c0_8 = arith.constant 0 : index
    %37 = vector.load %arg4[%c0_7, %c0_8] : memref<128x1xf32, #tpu.memory_space<vmem>>, vector<128x1xf32>
    %38 = vector.broadcast %37 : vector<128x1xf32> to vector<128x128xf32>
    %39 = arith.addf %36, %38 : vector<128x128xf32>
    %cst_9 = arith.constant 0.000000e+00 : f32
    %40 = vector.broadcast %cst_9 : f32 to vector<128x128xf32>
    %41 = arith.maximumf %39, %40 : vector<128x128xf32>
    %c0_10 = arith.constant 0 : index
    %c0_11 = arith.constant 0 : index
    %42 = vector.load %arg5[%c0_10, %c0_11] : memref<128x1xf32, #tpu.memory_space<vmem>>, vector<128x1xf32>
    %43 = vector.broadcast %42 : vector<128x1xf32> to vector<128x128xf32>
    %44 = arith.mulf %41, %43 : vector<128x128xf32>
    %cst_12 = arith.constant dense<0.000000e+00> : vector<128xf32>
    %45 = vector.multi_reduction <add>, %44, %cst_12 [0] : vector<128x128xf32> to vector<128xf32>
    %46 = vector.shape_cast %45 : vector<128xf32> to vector<1x128xf32>
    %c0_13 = arith.constant 0 : index
    %c0_14 = arith.constant 0 : index
    %47 = vector.load %arg6[%c0_13, %c0_14] : memref<1x128xf32, #tpu.memory_space<vmem>>, vector<1x128xf32>
    tpu.vector_store %arg6[%c0_13, %c0_14], %46 {strides = array<i32>} : memref<1x128xf32, #tpu.memory_space<vmem>>, vector<1x128xf32>,
    return
  }
  func.func @transform_0(%arg0: i32) -> (i32, i32) {
    %c0_i32 = arith.constant 0 : i32
    %c0_i32_0 = arith.constant 0 : i32
    return %c0_i32, %arg0 : i32, i32
  }
  func.func @transform_1(%arg0: i32) -> (i32, i32) {
    %c0_i32 = arith.constant 0 : i32
    %c0_i32_0 = arith.constant 0 : i32
    %c0_i32_1 = arith.constant 0 : i32
    return %c0_i32, %c0_i32_0 : i32, i32
  }
  func.func @transform_2(%arg0: i32) -> (i32, i32) {
    %c0_i32 = arith.constant 0 : i32
    %c0_i32_0 = arith.constant 0 : i32
    %c0_i32_1 = arith.constant 0 : i32
    return %c0_i32, %c0_i32_0 : i32, i32
  }
  func.func @transform_3(%arg0: i32) -> (i32, i32) {
    %c0_i32 = arith.constant 0 : i32
    %c0_i32_0 = arith.constant 0 : i32
    %c0_i32_1 = arith.constant 0 : i32
    return %c0_i32, %c0_i32_0 : i32, i32
  }
  func.func @transform_4(%arg0: i32) -> (i32, i32) {
    %c0_i32 = arith.constant 0 : i32
    %c0_i32_0 = arith.constant 0 : i32
    %c0_i32_1 = arith.constant 0 : i32
    return %c0_i32, %c0_i32_0 : i32, i32
  }
  func.func @transform_5(%arg0: i32) -> (i32, i32) {
    %c0_i32 = arith.constant 0 : i32
    %c0_i32_0 = arith.constant 0 : i32
    return %c0_i32, %arg0 : i32, i32
  }
}

</mosaic_0001>

<llo_original>
// kernel: tpu_custom_call.1
$region0: #{tpu_custom_call.1}
  #allocation0 [shape = 'u32[]', space=smem, size = 0x4, offset = 0x4, fixed_abs, tag = 'smem constant byte address 0x4 - core index']
  #allocation1 [shape = 'u32[144,128]{1,0:T(1,128)}', space=vmem, size = 0x12000, scoped, tag = 'internal scratch']
  %s0 = inlined_call_operand.hbm [shape: s32[5,128], index: 0, kind: input, shape index: {}]
  %s1 = inlined_call_operand.vmem [shape: f32[128,128], index: 1, kind: input, shape index: {}]
  %s2 = inlined_call_operand.vmem [shape: f32[128,128], index: 2, kind: input, shape index: {}]
  %s3 = inlined_call_operand.vmem [shape: f32[128,1], index: 3, kind: input, shape index: {}]
  %s4 = inlined_call_operand.vmem [shape: f32[128,1], index: 4, kind: input, shape index: {}]
  %s5 = inlined_call_operand.hbm [shape: f32[1,128], index: 5, kind: output, shape index: {}]
  %s6 = sld [smem:[#allocation0]]
  $region34: #{tpu_custom_call.1} parent=0
    _
  %s8 = ssub.s32 1, %s6
  %s9 = scalar_select 0, %s8, %s6
  $region1: #{tpu_custom_call.1} parent=0
    #allocation2 [shape = 'u8[4096]{0}', space=vmem, size = 0x1000, scoped, tag = 'input window, operand 0, single buffered']
    #allocation3 [shape = 's32[1]{0}', space=sflag, size = 0x4, scoped, tag = 'scoped memory for tpu_custom_call.1']
    #allocation4 [shape = 's32[1]{0}', space=sflag, size = 0x4, scoped, tag = 'scoped memory for tpu_custom_call.1']
    #allocation5 [shape = 'u8[512]{0}', space=vmem, size = 0x400, scoped, tag = 'output window, operand 0, single buffered']
    %10 = vsyncpa [#allocation3], 0
    %11 = vsyncpa [#allocation4], 0
    // Predicated region
    $region2: #{tpu_custom_call.1} parent=1 // pred_check
      _
    $region3: #{tpu_custom_call.1} parent=1 // pred_check_branch
      %13 = sbr.rel (0) target = $region5
    $region4: #{tpu_custom_call.1} parent=1 // pred_region
      %s15 = ssub.s32 128, 128
      %16 = vsyncadd [#allocation3], %s15
      %s18 = sshll.u32 [#allocation2], 4
      %s19 = int_to_ptr.vmem [resolvable:$true] %s18
      %21 = dma.hbm_to_vmem [thread:$0]  %s0, 128, %s19, [#allocation3]
    $region5: #{tpu_custom_call.1} parent=1 // pred_fallthru
      _
    // Predicated region
    $region6: #{tpu_custom_call.1} parent=1 // pred_check
      _
    $region7: #{tpu_custom_call.1} parent=1 // pred_check_branch
      %23 = sbr.rel (0) target = $region9
    $region8: #{tpu_custom_call.1} parent=1 // pred_region
      _
    $region9: #{tpu_custom_call.1} parent=1 // pred_fallthru
      _
    // Predicated region
    $region10: #{tpu_custom_call.1} parent=1 // pred_check
      _
    $region11: #{tpu_custom_call.1} parent=1 // pred_check_branch
      %25 = sbr.rel (0) target = $region13
    $region12: #{tpu_custom_call.1} parent=1 // pred_region
      _
    $region13: #{tpu_custom_call.1} parent=1 // pred_fallthru
      _
    // Predicated region
    $region14: #{tpu_custom_call.1} parent=1 // pred_check
      _
    $region15: #{tpu_custom_call.1} parent=1 // pred_check_branch
      %27 = sbr.rel (0) target = $region17
    $region16: #{tpu_custom_call.1} parent=1 // pred_region
      _
    $region17: #{tpu_custom_call.1} parent=1 // pred_fallthru
      _
    // Predicated region
    $region18: #{tpu_custom_call.1} parent=1 // pred_check
      _
    $region19: #{tpu_custom_call.1} parent=1 // pred_check_branch
      %29 = sbr.rel (0) target = $region21
    $region20: #{tpu_custom_call.1} parent=1 // pred_region
      _
    $region21: #{tpu_custom_call.1} parent=1 // pred_fallthru
      _
    // Predicated region
    $region22: #{tpu_custom_call.1} parent=1 // pred_check
      _
    $region23: #{tpu_custom_call.1} parent=1 // pred_check_branch
      %31 = sbr.rel (0) target = $region25
    $region24: #{tpu_custom_call.1} parent=1 // pred_region
      %32 = dma.done [#allocation3], 128
    $region25: #{tpu_custom_call.1} parent=1 // pred_fallthru
      _
    %v33 = vld [vmem:[#allocation2] sm:$0x1f]
    %v34 = vlaneseq
    %v35 = vshrl.u32 %v34, 7
    %v36 = vadd.s32 %v35, 8
    %v37 = vadd.s32 %v35, 16
    %v38 = vadd.s32 %v35, 24
    %v39 = vadd.s32 %v35, 32
    %v40 = vadd.s32 %v35, 40
    %v41 = vadd.s32 %v35, 48
    %v42 = vadd.s32 %v35, 56
    %v43 = vadd.s32 %v35, 64
    %v44 = vadd.s32 %v35, 72
    %v45 = vadd.s32 %v35, 80
    %v46 = vadd.s32 %v35, 88
    %v47 = vadd.s32 %v35, 96
    %v48 = vadd.s32 %v35, 104
    %v49 = vadd.s32 %v35, 112
    %v50 = vadd.s32 %v35, 120
    %v51 = vlaneseq
    %v52 = vshrl.u32 %v51, 7
    %v53 = vsub.s32 0, %v52
    %v54 = vrot.slane %v33, %v53
    %vm55 = vcmp.eq.s32.totalorder %v35, %v54
    %vm56 = vcmp.eq.s32.totalorder %v36, %v54
    %vm57 = vcmp.eq.s32.totalorder %v37, %v54
    %vm58 = vcmp.eq.s32.totalorder %v38, %v54
    %vm59 = vcmp.eq.s32.totalorder %v39, %v54
    %vm60 = vcmp.eq.s32.totalorder %v40, %v54
    %vm61 = vcmp.eq.s32.totalorder %v41, %v54
    %vm62 = vcmp.eq.s32.totalorder %v42, %v54
    %vm63 = vcmp.eq.s32.totalorder %v43, %v54
    %vm64 = vcmp.eq.s32.totalorder %v44, %v54
    %vm65 = vcmp.eq.s32.totalorder %v45, %v54
    %vm66 = vcmp.eq.s32.totalorder %v46, %v54
    %vm67 = vcmp.eq.s32.totalorder %v47, %v54
    %vm68 = vcmp.eq.s32.totalorder %v48, %v54
    %vm69 = vcmp.eq.s32.totalorder %v49, %v54
    %vm70 = vcmp.eq.s32.totalorder %v50, %v54
    %v71 = vsel %vm55, 1, 0
    %v72 = vsel %vm56, 1, 0
    %v73 = vsel %vm57, 1, 0
    %v74 = vsel %vm58, 1, 0
    %v75 = vsel %vm59, 1, 0
    %v76 = vsel %vm60, 1, 0
    %v77 = vsel %vm61, 1, 0
    %v78 = vsel %vm62, 1, 0
    %v79 = vsel %vm63, 1, 0
    %v80 = vsel %vm64, 1, 0
    %v81 = vsel %vm65, 1, 0
    %v82 = vsel %vm66, 1, 0
    %v83 = vsel %vm67, 1, 0
    %v84 = vsel %vm68, 1, 0
    %v85 = vsel %vm69, 1, 0
    %v86 = vsel %vm70, 1, 0
    %v87 = vcvt.s32.f32 %v71
    %v88 = vcvt.s32.f32 %v72
    %v89 = vcvt.s32.f32 %v73
    %v90 = vcvt.s32.f32 %v74
    %v91 = vcvt.s32.f32 %v75
    %v92 = vcvt.s32.f32 %v76
    %v93 = vcvt.s32.f32 %v77
    %v94 = vcvt.s32.f32 %v78
    %v95 = vcvt.s32.f32 %v79
    %v96 = vcvt.s32.f32 %v80
    %v97 = vcvt.s32.f32 %v81
    %v98 = vcvt.s32.f32 %v82
    %v99 = vcvt.s32.f32 %v83
    %v100 = vcvt.s32.f32 %v84
    %v101 = vcvt.s32.f32 %v85
    %v102 = vcvt.s32.f32 %v86
    %v103 = vlaneseq
    %v104 = vshrl.u32 %v103, 7
    %v105 = vsub.s32 1, %v104
    %v106 = vrot.slane %v33, %v105
    %vm107 = vcmp.eq.s32.totalorder %v35, %v106
    %vm108 = vcmp.eq.s32.totalorder %v36, %v106
    %vm109 = vcmp.eq.s32.totalorder %v37, %v106
    %vm110 = vcmp.eq.s32.totalorder %v38, %v106
    %vm111 = vcmp.eq.s32.totalorder %v39, %v106
    %vm112 = vcmp.eq.s32.totalorder %v40, %v106
    %vm113 = vcmp.eq.s32.totalorder %v41, %v106
    %vm114 = vcmp.eq.s32.totalorder %v42, %v106
    %vm115 = vcmp.eq.s32.totalorder %v43, %v106
    %vm116 = vcmp.eq.s32.totalorder %v44, %v106
    %vm117 = vcmp.eq.s32.totalorder %v45, %v106
    %vm118 = vcmp.eq.s32.totalorder %v46, %v106
    %vm119 = vcmp.eq.s32.totalorder %v47, %v106
    %vm120 = vcmp.eq.s32.totalorder %v48, %v106
    %vm121 = vcmp.eq.s32.totalorder %v49, %v106
    %vm122 = vcmp.eq.s32.totalorder %v50, %v106
    %v123 = vsel %vm107, 1, 0
    %v124 = vsel %vm108, 1, 0
    %v125 = vsel %vm109, 1, 0
    %v126 = vsel %vm110, 1, 0
    %v127 = vsel %vm111, 1, 0
    %v128 = vsel %vm112, 1, 0
    %v129 = vsel %vm113, 1, 0
    %v130 = vsel %vm114, 1, 0
    %v131 = vsel %vm115, 1, 0
    %v132 = vsel %vm116, 1, 0
    %v133 = vsel %vm117, 1, 0
    %v134 = vsel %vm118, 1, 0
    %v135 = vsel %vm119, 1, 0
    %v136 = vsel %vm120, 1, 0
    %v137 = vsel %vm121, 1, 0
    %v138 = vsel %vm122, 1, 0
    %v139 = vcvt.s32.f32 %v123
    %v140 = vcvt.s32.f32 %v124
    %v141 = vcvt.s32.f32 %v125
    %v142 = vcvt.s32.f32 %v126
    %v143 = vcvt.s32.f32 %v127
    %v144 = vcvt.s32.f32 %v128
    %v145 = vcvt.s32.f32 %v129
    %v146 = vcvt.s32.f32 %v130
    %v147 = vcvt.s32.f32 %v131
    %v148 = vcvt.s32.f32 %v132
    %v149 = vcvt.s32.f32 %v133
    %v150 = vcvt.s32.f32 %v134
    %v151 = vcvt.s32.f32 %v135
    %v152 = vcvt.s32.f32 %v136
    %v153 = vcvt.s32.f32 %v137
    %v154 = vcvt.s32.f32 %v138
    %v155 = vadd.f32 %v87, %v139
    %v156 = vadd.f32 %v88, %v140
    %v157 = vadd.f32 %v89, %v141
    %v158 = vadd.f32 %v90, %v142
    %v159 = vadd.f32 %v91, %v143
    %v160 = vadd.f32 %v92, %v144
    %v161 = vadd.f32 %v93, %v145
    %v162 = vadd.f32 %v94, %v146
    %v163 = vadd.f32 %v95, %v147
    %v164 = vadd.f32 %v96, %v148
    %v165 = vadd.f32 %v97, %v149
    %v166 = vadd.f32 %v98, %v150
    %v167 = vadd.f32 %v99, %v151
    %v168 = vadd.f32 %v100, %v152
    %v169 = vadd.f32 %v101, %v153
    %v170 = vadd.f32 %v102, %v154
    %v171 = vlaneseq
    %v172 = vshrl.u32 %v171, 7
    %v173 = vsub.s32 2, %v172
    %v174 = vrot.slane %v33, %v173
    %vm175 = vcmp.eq.s32.totalorder %v35, %v174
    %vm176 = vcmp.eq.s32.totalorder %v36, %v174
    %vm177 = vcmp.eq.s32.totalorder %v37, %v174
    %vm178 = vcmp.eq.s32.totalorder %v38, %v174
    %vm179 = vcmp.eq.s32.totalorder %v39, %v174
    %vm180 = vcmp.eq.s32.totalorder %v40, %v174
    %vm181 = vcmp.eq.s32.totalorder %v41, %v174
    %vm182 = vcmp.eq.s32.totalorder %v42, %v174
    %vm183 = vcmp.eq.s32.totalorder %v43, %v174
    %vm184 = vcmp.eq.s32.totalorder %v44, %v174
    %vm185 = vcmp.eq.s32.totalorder %v45, %v174
    %vm186 = vcmp.eq.s32.totalorder %v46, %v174
    %vm187 = vcmp.eq.s32.totalorder %v47, %v174
    %vm188 = vcmp.eq.s32.totalorder %v48, %v174
    %vm189 = vcmp.eq.s32.totalorder %v49, %v174
    %vm190 = vcmp.eq.s32.totalorder %v50, %v174
    %v191 = vsel %vm175, 1, 0
    %v192 = vsel %vm176, 1, 0
    %v193 = vsel %vm177, 1, 0
    %v194 = vsel %vm178, 1, 0
    %v195 = vsel %vm179, 1, 0
    %v196 = vsel %vm180, 1, 0
    %v197 = vsel %vm181, 1, 0
    %v198 = vsel %vm182, 1, 0
    %v199 = vsel %vm183, 1, 0
    %v200 = vsel %vm184, 1, 0
    %v201 = vsel %vm185, 1, 0
    %v202 = vsel %vm186, 1, 0
    %v203 = vsel %vm187, 1, 0
    %v204 = vsel %vm188, 1, 0
    %v205 = vsel %vm189, 1, 0
    %v206 = vsel %vm190, 1, 0
    %v207 = vcvt.s32.f32 %v191
    %v208 = vcvt.s32.f32 %v192
    %v209 = vcvt.s32.f32 %v193
    %v210 = vcvt.s32.f32 %v194
    %v211 = vcvt.s32.f32 %v195
    %v212 = vcvt.s32.f32 %v196
    %v213 = vcvt.s32.f32 %v197
    %v214 = vcvt.s32.f32 %v198
    %v215 = vcvt.s32.f32 %v199
    %v216 = vcvt.s32.f32 %v200
    %v217 = vcvt.s32.f32 %v201
    %v218 = vcvt.s32.f32 %v202
    %v219 = vcvt.s32.f32 %v203
    %v220 = vcvt.s32.f32 %v204
    %v221 = vcvt.s32.f32 %v205
    %v222 = vcvt.s32.f32 %v206
    %v223 = vadd.f32 %v155, %v207
    %v224 = vadd.f32 %v156, %v208
    %v225 = vadd.f32 %v157, %v209
    %v226 = vadd.f32 %v158, %v210
    %v227 = vadd.f32 %v159, %v211
    %v228 = vadd.f32 %v160, %v212
    %v229 = vadd.f32 %v161, %v213
    %v230 = vadd.f32 %v162, %v214
    %v231 = vadd.f32 %v163, %v215
    %v232 = vadd.f32 %v164, %v216
    %v233 = vadd.f32 %v165, %v217
    %v234 = vadd.f32 %v166, %v218
    %v235 = vadd.f32 %v167, %v219
    %v236 = vadd.f32 %v168, %v220
    %v237 = vadd.f32 %v169, %v221
    %v238 = vadd.f32 %v170, %v222
    %v239 = vlaneseq
    %v240 = vshrl.u32 %v239, 7
    %v241 = vsub.s32 3, %v240
    %v242 = vrot.slane %v33, %v241
    %vm243 = vcmp.eq.s32.totalorder %v35, %v242
    %vm244 = vcmp.eq.s32.totalorder %v36, %v242
    %vm245 = vcmp.eq.s32.totalorder %v37, %v242
    %vm246 = vcmp.eq.s32.totalorder %v38, %v242
    %vm247 = vcmp.eq.s32.totalorder %v39, %v242
    %vm248 = vcmp.eq.s32.totalorder %v40, %v242
    %vm249 = vcmp.eq.s32.totalorder %v41, %v242
    %vm250 = vcmp.eq.s32.totalorder %v42, %v242
    %vm251 = vcmp.eq.s32.totalorder %v43, %v242
    %vm252 = vcmp.eq.s32.totalorder %v44, %v242
    %vm253 = vcmp.eq.s32.totalorder %v45, %v242
    %vm254 = vcmp.eq.s32.totalorder %v46, %v242
    %vm255 = vcmp.eq.s32.totalorder %v47, %v242
    %vm256 = vcmp.eq.s32.totalorder %v48, %v242
    %vm257 = vcmp.eq.s32.totalorder %v49, %v242
    %vm258 = vcmp.eq.s32.totalorder %v50, %v242
    %v259 = vsel %vm243, 1, 0
    %v260 = vsel %vm244, 1, 0
    %v261 = vsel %vm245, 1, 0
    %v262 = vsel %vm246, 1, 0
    %v263 = vsel %vm247, 1, 0
    %v264 = vsel %vm248, 1, 0
    %v265 = vsel %vm249, 1, 0
    %v266 = vsel %vm250, 1, 0
    %v267 = vsel %vm251, 1, 0
    %v268 = vsel %vm252, 1, 0
    %v269 = vsel %vm253, 1, 0
    %v270 = vsel %vm254, 1, 0
    %v271 = vsel %vm255, 1, 0
    %v272 = vsel %vm256, 1, 0
    %v273 = vsel %vm257, 1, 0
    %v274 = vsel %vm258, 1, 0
    %v275 = vcvt.s32.f32 %v259
    %v276 = vcvt.s32.f32 %v260
    %v277 = vcvt.s32.f32 %v261
    %v278 = vcvt.s32.f32 %v262
    %v279 = vcvt.s32.f32 %v263
    %v280 = vcvt.s32.f32 %v264
    %v281 = vcvt.s32.f32 %v265
    %v282 = vcvt.s32.f32 %v266
    %v283 = vcvt.s32.f32 %v267
    %v284 = vcvt.s32.f32 %v268
    %v285 = vcvt.s32.f32 %v269
    %v286 = vcvt.s32.f32 %v270
    %v287 = vcvt.s32.f32 %v271
    %v288 = vcvt.s32.f32 %v272
    %v289 = vcvt.s32.f32 %v273
    %v290 = vcvt.s32.f32 %v274
    %v291 = vadd.f32 %v223, %v275
    %v292 = vadd.f32 %v224, %v276
    %v293 = vadd.f32 %v225, %v277
    %v294 = vadd.f32 %v226, %v278
    %v295 = vadd.f32 %v227, %v279
    %v296 = vadd.f32 %v228, %v280
    %v297 = vadd.f32 %v229, %v281
    %v298 = vadd.f32 %v230, %v282
    %v299 = vadd.f32 %v231, %v283
    %v300 = vadd.f32 %v232, %v284
    %v301 = vadd.f32 %v233, %v285
    %v302 = vadd.f32 %v234, %v286
    %v303 = vadd.f32 %v235, %v287
    %v304 = vadd.f32 %v236, %v288
    %v305 = vadd.f32 %v237, %v289
    %v306 = vadd.f32 %v238, %v290
    %v307 = vlaneseq
    %v308 = vshrl.u32 %v307, 7
    %v309 = vsub.s32 4, %v308
    %v310 = vrot.slane %v33, %v309
    %vm311 = vcmp.eq.s32.totalorder %v35, %v310
    %vm312 = vcmp.eq.s32.totalorder %v36, %v310
    %vm313 = vcmp.eq.s32.totalorder %v37, %v310
    %vm314 = vcmp.eq.s32.totalorder %v38, %v310
    %vm315 = vcmp.eq.s32.totalorder %v39, %v310
    %vm316 = vcmp.eq.s32.totalorder %v40, %v310
    %vm317 = vcmp.eq.s32.totalorder %v41, %v310
    %vm318 = vcmp.eq.s32.totalorder %v42, %v310
    %vm319 = vcmp.eq.s32.totalorder %v43, %v310
    %vm320 = vcmp.eq.s32.totalorder %v44, %v310
    %vm321 = vcmp.eq.s32.totalorder %v45, %v310
    %vm322 = vcmp.eq.s32.totalorder %v46, %v310
    %vm323 = vcmp.eq.s32.totalorder %v47, %v310
    %vm324 = vcmp.eq.s32.totalorder %v48, %v310
    %vm325 = vcmp.eq.s32.totalorder %v49, %v310
    %vm326 = vcmp.eq.s32.totalorder %v50, %v310
    %v327 = vsel %vm311, 1, 0
    %v328 = vsel %vm312, 1, 0
    %v329 = vsel %vm313, 1, 0
    %v330 = vsel %vm314, 1, 0
    %v331 = vsel %vm315, 1, 0
    %v332 = vsel %vm316, 1, 0
    %v333 = vsel %vm317, 1, 0
    %v334 = vsel %vm318, 1, 0
    %v335 = vsel %vm319, 1, 0
    %v336 = vsel %vm320, 1, 0
    %v337 = vsel %vm321, 1, 0
    %v338 = vsel %vm322, 1, 0
    %v339 = vsel %vm323, 1, 0
    %v340 = vsel %vm324, 1, 0
    %v341 = vsel %vm325, 1, 0
    %v342 = vsel %vm326, 1, 0
    %v343 = vcvt.s32.f32 %v327
    %v344 = vcvt.s32.f32 %v328
    %v345 = vcvt.s32.f32 %v329
    %v346 = vcvt.s32.f32 %v330
    %v347 = vcvt.s32.f32 %v331
    %v348 = vcvt.s32.f32 %v332
    %v349 = vcvt.s32.f32 %v333
    %v350 = vcvt.s32.f32 %v334
    %v351 = vcvt.s32.f32 %v335
    %v352 = vcvt.s32.f32 %v336
    %v353 = vcvt.s32.f32 %v337
    %v354 = vcvt.s32.f32 %v338
    %v355 = vcvt.s32.f32 %v339
    %v356 = vcvt.s32.f32 %v340
    %v357 = vcvt.s32.f32 %v341
    %v358 = vcvt.s32.f32 %v342
    %v359 = vadd.f32 %v291, %v343
    %v360 = vadd.f32 %v292, %v344
    %v361 = vadd.f32 %v293, %v345
    %v362 = vadd.f32 %v294, %v346
    %v363 = vadd.f32 %v295, %v347
    %v364 = vadd.f32 %v296, %v348
    %v365 = vadd.f32 %v297, %v349
    %v366 = vadd.f32 %v298, %v350
    %v367 = vadd.f32 %v299, %v351
    %v368 = vadd.f32 %v300, %v352
    %v369 = vadd.f32 %v301, %v353
    %v370 = vadd.f32 %v302, %v354
    %v371 = vadd.f32 %v303, %v355
    %v372 = vadd.f32 %v304, %v356
    %v373 = vadd.f32 %v305, %v357
    %v374 = vadd.f32 %v306, %v358
    %v375 = vld [vmem:[%s1] sm:$0xff]
    %v376 = vld [vmem:[%s1 + $0x8] sm:$0xff]
    %v377 = vld [vmem:[%s1 + $0x10] sm:$0xff]
    %v378 = vld [vmem:[%s1 + $0x18] sm:$0xff]
    %v379 = vld [vmem:[%s1 + $0x20] sm:$0xff]
    %v380 = vld [vmem:[%s1 + $0x28] sm:$0xff]
    %v381 = vld [vmem:[%s1 + $0x30] sm:$0xff]
    %v382 = vld [vmem:[%s1 + $0x38] sm:$0xff]
    %v383 = vld [vmem:[%s1 + $0x40] sm:$0xff]
    %v384 = vld [vmem:[%s1 + $0x48] sm:$0xff]
    %v385 = vld [vmem:[%s1 + $0x50] sm:$0xff]
    %v386 = vld [vmem:[%s1 + $0x58] sm:$0xff]
    %v387 = vld [vmem:[%s1 + $0x60] sm:$0xff]
    %v388 = vld [vmem:[%s1 + $0x68] sm:$0xff]
    %v389 = vld [vmem:[%s1 + $0x70] sm:$0xff]
    %v390 = vld [vmem:[%s1 + $0x78] sm:$0xff]
    %391 = vmatprep.subr.mxu0 0.0
    %392 = vmatpush1.msra.mxu0 %v359
    %393 = vmatprep.subr.mxu0 0.0
    %394 = vmatpush1.msra.mxu0 %v360
    %395 = vmatprep.subr.mxu0 0.0
    %396 = vmatpush1.msra.mxu0 %v361
    %397 = vmatprep.subr.mxu0 0.0
    %398 = vmatpush1.msra.mxu0 %v362
    %399 = vmatprep.subr.mxu0 0.0
    %400 = vmatpush1.msra.mxu0 %v363
    %401 = vmatprep.subr.mxu0 0.0
    %402 = vmatpush1.msra.mxu0 %v364
    %403 = vmatprep.subr.mxu0 0.0
    %404 = vmatpush1.msra.mxu0 %v365
    %405 = vmatprep.subr.mxu0 0.0
    %406 = vmatpush1.msra.mxu0 %v366
    %407 = vmatprep.subr.mxu0 0.0
    %408 = vmatpush1.msra.mxu0 %v367
    %409 = vmatprep.subr.mxu0 0.0
    %410 = vmatpush1.msra.mxu0 %v368
    %411 = vmatprep.subr.mxu0 0.0
    %412 = vmatpush1.msra.mxu0 %v369
    %413 = vmatprep.subr.mxu0 0.0
    %414 = vmatpush1.msra.mxu0 %v370
    %415 = vmatprep.subr.mxu0 0.0
    %416 = vmatpush1.msra.mxu0 %v371
    %417 = vmatprep.subr.mxu0 0.0
    %418 = vmatpush1.msra.mxu0 %v372
    %419 = vmatprep.subr.mxu0 0.0
    %420 = vmatpush1.msra.mxu0 %v373
    %421 = vmatprep.subr.mxu0 0.0
    %422 = vmatpush1.msra.mxu0 %v374
    %423 = vmatprep.subr.mxu0 0.0
    %424 = vmatpush1.msra.mxu0 0.0
    %425 = vmatprep.subr.mxu0 0.0
    %426 = vmatpush1.msra.mxu0 0.0
    %427 = vmatprep.subr.mxu0 0.0
    %428 = vmatpush1.msra.mxu0 0.0
    %429 = vmatprep.subr.mxu0 0.0
    %430 = vmatpush1.msra.mxu0 0.0
    %431 = vmatprep.subr.mxu0 0.0
    %432 = vmatpush1.msra.mxu0 0.0
    %433 = vmatprep.subr.mxu0 0.0
    %434 = vmatpush1.msra.mxu0 0.0
    %435 = vmatprep.subr.mxu0 0.0
    %436 = vmatpush1.msra.mxu0 0.0
    %437 = vmatprep.subr.mxu0 0.0
    %438 = vmatpush1.msra.mxu0 0.0
    %439 = vmatprep.subr.mxu0 0.0
    %440 = vmatpush1.msra.mxu0 0.0
    %441 = vmatprep.subr.mxu0 0.0
    %442 = vmatpush1.msra.mxu0 0.0
    %443 = vmatprep.subr.mxu0 0.0
    %444 = vmatpush1.msra.mxu0 0.0
    %445 = vmatprep.subr.mxu0 0.0
    %446 = vmatpush1.msra.mxu0 0.0
    %447 = vmatprep.subr.mxu0 0.0
    %448 = vmatpush1.msra.mxu0 0.0
    %449 = vmatprep.subr.mxu0 0.0
    %450 = vmatpush1.msra.mxu0 0.0
    %451 = vmatprep.subr.mxu0 0.0
    %452 = vmatpush1.msra.mxu0 0.0
    %453 = vmatprep.subr.mxu0 0.0
    %454 = vmatpush1.msra.mxu0 0.0
    %455 = vmatprep.mubr.f32.mxu0 0.0
    %456 = vmatmul.mubr.f32.gmra.mrb[0].mxu0 %v375
    %v457 = vpop.f32.mrb[0].mxu0
    %v458 = vadd.f32 0.0, %v457
    %v459 = vpop.f32.mrb[0].mxu0
    %460 = vmatprep.mubr.f32.mxu0 0.0
    %461 = vmatmul.mubr.f32.gmra.mrb[0].mxu0 %v376
    %v462 = vpop.f32.mrb[0].mxu0
    %v463 = vadd.f32 0.0, %v462
    %v464 = vpop.f32.mrb[0].mxu0
    %465 = vmatprep.mubr.f32.mxu0 0.0
    %466 = vmatmul.mubr.f32.gmra.mrb[0].mxu0 %v377
    %v467 = vpop.f32.mrb[0].mxu0
    %v468 = vadd.f32 0.0, %v467
    %v469 = vpop.f32.mrb[0].mxu0
    %470 = vmatprep.mubr.f32.mxu0 0.0
    %471 = vmatmul.mubr.f32.gmra.mrb[0].mxu0 %v378
    %v472 = vpop.f32.mrb[0].mxu0
    %v473 = vadd.f32 0.0, %v472
    %v474 = vpop.f32.mrb[0].mxu0
    %475 = vmatprep.mubr.f32.mxu0 0.0
    %476 = vmatmul.mubr.f32.gmra.mrb[0].mxu0 %v379
    %v477 = vpop.f32.mrb[0].mxu0
    %v478 = vadd.f32 0.0, %v477
    %v479 = vpop.f32.mrb[0].mxu0
    %480 = vmatprep.mubr.f32.mxu0 0.0
    %481 = vmatmul.mubr.f32.gmra.mrb[0].mxu0 %v380
    %v482 = vpop.f32.mrb[0].mxu0
    %v483 = vadd.f32 0.0, %v482
    %v484 = vpop.f32.mrb[0].mxu0
    %485 = vmatprep.mubr.f32.mxu0 0.0
    %486 = vmatmul.mubr.f32.gmra.mrb[0].mxu0 %v381
    %v487 = vpop.f32.mrb[0].mxu0
    %v488 = vadd.f32 0.0, %v487
    %v489 = vpop.f32.mrb[0].mxu0
    %490 = vmatprep.mubr.f32.mxu0 0.0
    %491 = vmatmul.mubr.f32.gmra.mrb[0].mxu0 %v382
    %v492 = vpop.f32.mrb[0].mxu0
    %v493 = vadd.f32 0.0, %v492
    %v494 = vpop.f32.mrb[0].mxu0
    %495 = vmatprep.mubr.f32.mxu0 0.0
    %496 = vmatmul.mubr.f32.gmra.mrb[0].mxu0 %v383
    %v497 = vpop.f32.mrb[0].mxu0
    %v498 = vadd.f32 0.0, %v497
    %v499 = vpop.f32.mrb[0].mxu0
    %500 = vmatprep.mubr.f32.mxu0 0.0
    %501 = vmatmul.mubr.f32.gmra.mrb[0].mxu0 %v384
    %v502 = vpop.f32.mrb[0].mxu0
    %v503 = vadd.f32 0.0, %v502
    %v504 = vpop.f32.mrb[0].mxu0
    %505 = vmatprep.mubr.f32.mxu0 0.0
    %506 = vmatmul.mubr.f32.gmra.mrb[0].mxu0 %v385
    %v507 = vpop.f32.mrb[0].mxu0
    %v508 = vadd.f32 0.0, %v507
    %v509 = vpop.f32.mrb[0].mxu0
    %510 = vmatprep.mubr.f32.mxu0 0.0
    %511 = vmatmul.mubr.f32.gmra.mrb[0].mxu0 %v386
    %v512 = vpop.f32.mrb[0].mxu0
    %v513 = vadd.f32 0.0, %v512
    %v514 = vpop.f32.mrb[0].mxu0
    %515 = vmatprep.mubr.f32.mxu0 0.0
    %516 = vmatmul.mubr.f32.gmra.mrb[0].mxu0 %v387
    %v517 = vpop.f32.mrb[0].mxu0
    %v518 = vadd.f32 0.0, %v517
    %v519 = vpop.f32.mrb[0].mxu0
    %520 = vmatprep.mubr.f32.mxu0 0.0
    %521 = vmatmul.mubr.f32.gmra.mrb[0].mxu0 %v388
    %v522 = vpop.f32.mrb[0].mxu0
    %v523 = vadd.f32 0.0, %v522
    %v524 = vpop.f32.mrb[0].mxu0
    %525 = vmatprep.mubr.f32.mxu0 0.0
    %526 = vmatmul.mubr.f32.gmra.mrb[0].mxu0 %v389
    %v527 = vpop.f32.mrb[0].mxu0
    %v528 = vadd.f32 0.0, %v527
    %v529 = vpop.f32.mrb[0].mxu0
    %530 = vmatprep.mubr.f32.mxu0 0.0
    %531 = vmatmul.mubr.f32.gmra.mrb[0].mxu0 %v390
    %v532 = vpop.f32.mrb[0].mxu0
    %v533 = vadd.f32 0.0, %v532
    %v534 = vpop.f32.mrb[0].mxu0
    %535 = vdwg.mxu0
    %v536 = vmax.f32 %v458, 0.0
    %v537 = vmax.f32 %v463, 0.0
    %v538 = vmax.f32 %v468, 0.0
    %v539 = vmax.f32 %v473, 0.0
    %v540 = vmax.f32 %v478, 0.0
    %v541 = vmax.f32 %v483, 0.0
    %v542 = vmax.f32 %v488, 0.0
    %v543 = vmax.f32 %v493, 0.0
    %v544 = vmax.f32 %v498, 0.0
    %v545 = vmax.f32 %v503, 0.0
    %v546 = vmax.f32 %v508, 0.0
    %v547 = vmax.f32 %v513, 0.0
    %v548 = vmax.f32 %v518, 0.0
    %v549 = vmax.f32 %v523, 0.0
    %v550 = vmax.f32 %v528, 0.0
    %v551 = vmax.f32 %v533, 0.0
    %v552 = vld [vmem:[%s2] sm:$0xff]
    %v553 = vld [vmem:[%s2 + $0x8] sm:$0xff]
    %v554 = vld [vmem:[%s2 + $0x10] sm:$0xff]
    %v555 = vld [vmem:[%s2 + $0x18] sm:$0xff]
    %v556 = vld [vmem:[%s2 + $0x20] sm:$0xff]
    %v557 = vld [vmem:[%s2 + $0x28] sm:$0xff]
    %v558 = vld [vmem:[%s2 + $0x30] sm:$0xff]
    %v559 = vld [vmem:[%s2 + $0x38] sm:$0xff]
    %v560 = vld [vmem:[%s2 + $0x40] sm:$0xff]
    %v561 = vld [vmem:[%s2 + $0x48] sm:$0xff]
    %v562 = vld [vmem:[%s2 + $0x50] sm:$0xff]
    %v563 = vld [vmem:[%s2 + $0x58] sm:$0xff]
    %v564 = vld [vmem:[%s2 + $0x60] sm:$0xff]
    %v565 = vld [vmem:[%s2 + $0x68] sm:$0xff]
    %v566 = vld [vmem:[%s2 + $0x70] sm:$0xff]
    %v567 = vld [vmem:[%s2 + $0x78] sm:$0xff]
    %v568 = vld [vmem:[%s3] sm:$0xff]
    %v569 = vld [vmem:[%s3 + $0x8] sm:$0xff]
    %v570 = vld [vmem:[%s3 + $0x10] sm:$0xff]
    %v571 = vld [vmem:[%s3 + $0x18] sm:$0xff]
    %v572 = vld [vmem:[%s3 + $0x20] sm:$0xff]
    %v573 = vld [vmem:[%s3 + $0x28] sm:$0xff]
    %v574 = vld [vmem:[%s3 + $0x30] sm:$0xff]
    %v575 = vld [vmem:[%s3 + $0x38] sm:$0xff]
    %v576 = vld [vmem:[%s3 + $0x40] sm:$0xff]
    %v577 = vld [vmem:[%s3 + $0x48] sm:$0xff]
    %v578 = vld [vmem:[%s3 + $0x50] sm:$0xff]
    %v579 = vld [vmem:[%s3 + $0x58] sm:$0xff]
    %v580 = vld [vmem:[%s3 + $0x60] sm:$0xff]
    %v581 = vld [vmem:[%s3 + $0x68] sm:$0xff]
    %v582 = vld [vmem:[%s3 + $0x70] sm:$0xff]
    %v583 = vld [vmem:[%s3 + $0x78] sm:$0xff]
    %585 = vset.pattern.permute.xlu0 0
    %586 = vperm.xlu0 %585, %v568
    %v587 = vpop.permute.xlu0 %586
    %590 = vset.pattern.permute.xlu0 0
    %591 = vperm.xlu0 %590, %v569
    %v592 = vpop.permute.xlu0 %591
    %595 = vset.pattern.permute.xlu0 0
    %596 = vperm.xlu0 %595, %v570
    %v597 = vpop.permute.xlu0 %596
    %600 = vset.pattern.permute.xlu0 0
    %601 = vperm.xlu0 %600, %v571
    %v602 = vpop.permute.xlu0 %601
    %605 = vset.pattern.permute.xlu0 0
    %606 = vperm.xlu0 %605, %v572
    %v607 = vpop.permute.xlu0 %606
    %610 = vset.pattern.permute.xlu0 0
    %611 = vperm.xlu0 %610, %v573
    %v612 = vpop.permute.xlu0 %611
    %615 = vset.pattern.permute.xlu0 0
    %616 = vperm.xlu0 %615, %v574
    %v617 = vpop.permute.xlu0 %616
    %620 = vset.pattern.permute.xlu0 0
    %621 = vperm.xlu0 %620, %v575
    %v622 = vpop.permute.xlu0 %621
    %625 = vset.pattern.permute.xlu0 0
    %626 = vperm.xlu0 %625, %v576
    %v627 = vpop.permute.xlu0 %626
    %630 = vset.pattern.permute.xlu0 0
    %631 = vperm.xlu0 %630, %v577
    %v632 = vpop.permute.xlu0 %631
    %635 = vset.pattern.permute.xlu0 0
    %636 = vperm.xlu0 %635, %v578
    %v637 = vpop.permute.xlu0 %636
    %640 = vset.pattern.permute.xlu0 0
    %641 = vperm.xlu0 %640, %v579
    %v642 = vpop.permute.xlu0 %641
    %645 = vset.pattern.permute.xlu0 0
    %646 = vperm.xlu0 %645, %v580
    %v647 = vpop.permute.xlu0 %646
    %650 = vset.pattern.permute.xlu0 0
    %651 = vperm.xlu0 %650, %v581
    %v652 = vpop.permute.xlu0 %651
    %655 = vset.pattern.permute.xlu0 0
    %656 = vperm.xlu0 %655, %v582
    %v657 = vpop.permute.xlu0 %656
    %660 = vset.pattern.permute.xlu0 0
    %661 = vperm.xlu0 %660, %v583
    %v662 = vpop.permute.xlu0 %661
    %664 = vmatprep.subr.mxu0 0.0
    %665 = vmatpush1.msra.mxu0 %v536
    %666 = vmatprep.subr.mxu0 0.0
    %667 = vmatpush1.msra.mxu0 %v537
    %668 = vmatprep.subr.mxu0 0.0
    %669 = vmatpush1.msra.mxu0 %v538
    %670 = vmatprep.subr.mxu0 0.0
    %671 = vmatpush1.msra.mxu0 %v539
    %672 = vmatprep.subr.mxu0 0.0
    %673 = vmatpush1.msra.mxu0 %v540
    %674 = vmatprep.subr.mxu0 0.0
    %675 = vmatpush1.msra.mxu0 %v541
    %676 = vmatprep.subr.mxu0 0.0
    %677 = vmatpush1.msra.mxu0 %v542
    %678 = vmatprep.subr.mxu0 0.0
    %679 = vmatpush1.msra.mxu0 %v543
    %680 = vmatprep.subr.mxu0 0.0
    %681 = vmatpush1.msra.mxu0 %v544
    %682 = vmatprep.subr.mxu0 0.0
    %683 = vmatpush1.msra.mxu0 %v545
    %684 = vmatprep.subr.mxu0 0.0
    %685 = vmatpush1.msra.mxu0 %v546
    %686 = vmatprep.subr.mxu0 0.0
    %687 = vmatpush1.msra.mxu0 %v547
    %688 = vmatprep.subr.mxu0 0.0
    %689 = vmatpush1.msra.mxu0 %v548
    %690 = vmatprep.subr.mxu0 0.0
    %691 = vmatpush1.msra.mxu0 %v549
    %692 = vmatprep.subr.mxu0 0.0
    %693 = vmatpush1.msra.mxu0 %v550
    %694 = vmatprep.subr.mxu0 0.0
    %695 = vmatpush1.msra.mxu0 %v551
    %696 = vmatprep.subr.mxu0 0.0
    %697 = vmatpush1.msra.mxu0 0.0
    %698 = vmatprep.subr.mxu0 0.0
    %699 = vmatpush1.msra.mxu0 0.0
    %700 = vmatprep.subr.mxu0 0.0
    %701 = vmatpush1.msra.mxu0 0.0
    %702 = vmatprep.subr.mxu0 0.0
    %703 = vmatpush1.msra.mxu0 0.0
    %704 = vmatprep.subr.mxu0 0.0
    %705 = vmatpush1.msra.mxu0 0.0
    %706 = vmatprep.subr.mxu0 0.0
    %707 = vmatpush1.msra.mxu0 0.0
    %708 = vmatprep.subr.mxu0 0.0
    %709 = vmatpush1.msra.mxu0 0.0
    %710 = vmatprep.subr.mxu0 0.0
    %711 = vmatpush1.msra.mxu0 0.0
    %712 = vmatprep.subr.mxu0 0.0
    %713 = vmatpush1.msra.mxu0 0.0
    %714 = vmatprep.subr.mxu0 0.0
    %715 = vmatpush1.msra.mxu0 0.0
    %716 = vmatprep.subr.mxu0 0.0
    %717 = vmatpush1.msra.mxu0 0.0
    %718 = vmatprep.subr.mxu0 0.0
    %719 = vmatpush1.msra.mxu0 0.0
    %720 = vmatprep.subr.mxu0 0.0
    %721 = vmatpush1.msra.mxu0 0.0
    %722 = vmatprep.subr.mxu0 0.0
    %723 = vmatpush1.msra.mxu0 0.0
    %724 = vmatprep.subr.mxu0 0.0
    %725 = vmatpush1.msra.mxu0 0.0
    %726 = vmatprep.subr.mxu0 0.0
    %727 = vmatpush1.msra.mxu0 0.0
    %728 = vmatprep.mubr.f32.mxu0 0.0
    %729 = vmatmul.mubr.f32.gmra.mrb[0].mxu0 %v552
    %v730 = vpop.f32.mrb[0].mxu0
    %v731 = vadd.f32 %v587, %v730
    %v732 = vpop.f32.mrb[0].mxu0
    %733 = vmatprep.mubr.f32.mxu0 0.0
    %734 = vmatmul.mubr.f32.gmra.mrb[0].mxu0 %v553
    %v735 = vpop.f32.mrb[0].mxu0
    %v736 = vadd.f32 %v592, %v735
    %v737 = vpop.f32.mrb[0].mxu0
    %738 = vmatprep.mubr.f32.mxu0 0.0
    %739 = vmatmul.mubr.f32.gmra.mrb[0].mxu0 %v554
    %v740 = vpop.f32.mrb[0].mxu0
    %v741 = vadd.f32 %v597, %v740
    %v742 = vpop.f32.mrb[0].mxu0
    %743 = vmatprep.mubr.f32.mxu0 0.0
    %744 = vmatmul.mubr.f32.gmra.mrb[0].mxu0 %v555
    %v745 = vpop.f32.mrb[0].mxu0
    %v746 = vadd.f32 %v602, %v745
    %v747 = vpop.f32.mrb[0].mxu0
    %748 = vmatprep.mubr.f32.mxu0 0.0
    %749 = vmatmul.mubr.f32.gmra.mrb[0].mxu0 %v556
    %v750 = vpop.f32.mrb[0].mxu0
    %v751 = vadd.f32 %v607, %v750
    %v752 = vpop.f32.mrb[0].mxu0
    %753 = vmatprep.mubr.f32.mxu0 0.0
    %754 = vmatmul.mubr.f32.gmra.mrb[0].mxu0 %v557
    %v755 = vpop.f32.mrb[0].mxu0
    %v756 = vadd.f32 %v612, %v755
    %v757 = vpop.f32.mrb[0].mxu0
    %758 = vmatprep.mubr.f32.mxu0 0.0
    %759 = vmatmul.mubr.f32.gmra.mrb[0].mxu0 %v558
    %v760 = vpop.f32.mrb[0].mxu0
    %v761 = vadd.f32 %v617, %v760
    %v762 = vpop.f32.mrb[0].mxu0
    %763 = vmatprep.mubr.f32.mxu0 0.0
    %764 = vmatmul.mubr.f32.gmra.mrb[0].mxu0 %v559
    %v765 = vpop.f32.mrb[0].mxu0
    %v766 = vadd.f32 %v622, %v765
    %v767 = vpop.f32.mrb[0].mxu0
    %768 = vmatprep.mubr.f32.mxu0 0.0
    %769 = vmatmul.mubr.f32.gmra.mrb[0].mxu0 %v560
    %v770 = vpop.f32.mrb[0].mxu0
    %v771 = vadd.f32 %v627, %v770
    %v772 = vpop.f32.mrb[0].mxu0
    %773 = vmatprep.mubr.f32.mxu0 0.0
    %774 = vmatmul.mubr.f32.gmra.mrb[0].mxu0 %v561
    %v775 = vpop.f32.mrb[0].mxu0
    %v776 = vadd.f32 %v632, %v775
    %v777 = vpop.f32.mrb[0].mxu0
    %778 = vmatprep.mubr.f32.mxu0 0.0
    %779 = vmatmul.mubr.f32.gmra.mrb[0].mxu0 %v562
    %v780 = vpop.f32.mrb[0].mxu0
    %v781 = vadd.f32 %v637, %v780
    %v782 = vpop.f32.mrb[0].mxu0
    %783 = vmatprep.mubr.f32.mxu0 0.0
    %784 = vmatmul.mubr.f32.gmra.mrb[0].mxu0 %v563
    %v785 = vpop.f32.mrb[0].mxu0
    %v786 = vadd.f32 %v642, %v785
    %v787 = vpop.f32.mrb[0].mxu0
    %788 = vmatprep.mubr.f32.mxu0 0.0
    %789 = vmatmul.mubr.f32.gmra.mrb[0].mxu0 %v564
    %v790 = vpop.f32.mrb[0].mxu0
    %v791 = vadd.f32 %v647, %v790
    %v792 = vpop.f32.mrb[0].mxu0
    %793 = vmatprep.mubr.f32.mxu0 0.0
    %794 = vmatmul.mubr.f32.gmra.mrb[0].mxu0 %v565
    %v795 = vpop.f32.mrb[0].mxu0
    %v796 = vadd.f32 %v652, %v795
    %v797 = vpop.f32.mrb[0].mxu0
    %798 = vmatprep.mubr.f32.mxu0 0.0
    %799 = vmatmul.mubr.f32.gmra.mrb[0].mxu0 %v566
    %v800 = vpop.f32.mrb[0].mxu0
    %v801 = vadd.f32 %v657, %v800
    %v802 = vpop.f32.mrb[0].mxu0
    %803 = vmatprep.mubr.f32.mxu0 0.0
    %804 = vmatmul.mubr.f32.gmra.mrb[0].mxu0 %v567
    %v805 = vpop.f32.mrb[0].mxu0
    %v806 = vadd.f32 %v662, %v805
    %v807 = vpop.f32.mrb[0].mxu0
    %808 = vdwg.mxu0
    %v809 = vmax.f32 %v731, 0.0
    %v810 = vmax.f32 %v736, 0.0
    %v811 = vmax.f32 %v741, 0.0
    %v812 = vmax.f32 %v746, 0.0
    %v813 = vmax.f32 %v751, 0.0
    %v814 = vmax.f32 %v756, 0.0
    %v815 = vmax.f32 %v761, 0.0
    %v816 = vmax.f32 %v766, 0.0
    %v817 = vmax.f32 %v771, 0.0
    %v818 = vmax.f32 %v776, 0.0
    %v819 = vmax.f32 %v781, 0.0
    %v820 = vmax.f32 %v786, 0.0
    %v821 = vmax.f32 %v791, 0.0
    %v822 = vmax.f32 %v796, 0.0
    %v823 = vmax.f32 %v801, 0.0
    %v824 = vmax.f32 %v806, 0.0
    %v825 = vld [vmem:[%s4] sm:$0xff]
    %v826 = vld [vmem:[%s4 + $0x8] sm:$0xff]
    %v827 = vld [vmem:[%s4 + $0x10] sm:$0xff]
    %v828 = vld [vmem:[%s4 + $0x18] sm:$0xff]
    %v829 = vld [vmem:[%s4 + $0x20] sm:$0xff]
    %v830 = vld [vmem:[%s4 + $0x28] sm:$0xff]
    %v831 = vld [vmem:[%s4 + $0x30] sm:$0xff]
    %v832 = vld [vmem:[%s4 + $0x38] sm:$0xff]
    %v833 = vld [vmem:[%s4 + $0x40] sm:$0xff]
    %v834 = vld [vmem:[%s4 + $0x48] sm:$0xff]
    %v835 = vld [vmem:[%s4 + $0x50] sm:$0xff]
    %v836 = vld [vmem:[%s4 + $0x58] sm:$0xff]
    %v837 = vld [vmem:[%s4 + $0x60] sm:$0xff]
    %v838 = vld [vmem:[%s4 + $0x68] sm:$0xff]
    %v839 = vld [vmem:[%s4 + $0x70] sm:$0xff]
    %v840 = vld [vmem:[%s4 + $0x78] sm:$0xff]
    %842 = vset.pattern.permute.xlu0 0
    %843 = vperm.xlu0 %842, %v825
    %v844 = vpop.permute.xlu0 %843
    %847 = vset.pattern.permute.xlu0 0
    %848 = vperm.xlu0 %847, %v826
    %v849 = vpop.permute.xlu0 %848
    %852 = vset.pattern.permute.xlu0 0
    %853 = vperm.xlu0 %852, %v827
    %v854 = vpop.permute.xlu0 %853
    %857 = vset.pattern.permute.xlu0 0
    %858 = vperm.xlu0 %857, %v828
    %v859 = vpop.permute.xlu0 %858
    %862 = vset.pattern.permute.xlu0 0
    %863 = vperm.xlu0 %862, %v829
    %v864 = vpop.permute.xlu0 %863
    %867 = vset.pattern.permute.xlu0 0
    %868 = vperm.xlu0 %867, %v830
    %v869 = vpop.permute.xlu0 %868
    %872 = vset.pattern.permute.xlu0 0
    %873 = vperm.xlu0 %872, %v831
    %v874 = vpop.permute.xlu0 %873
    %877 = vset.pattern.permute.xlu0 0
    %878 = vperm.xlu0 %877, %v832
    %v879 = vpop.permute.xlu0 %878
    %882 = vset.pattern.permute.xlu0 0
    %883 = vperm.xlu0 %882, %v833
    %v884 = vpop.permute.xlu0 %883
    %887 = vset.pattern.permute.xlu0 0
    %888 = vperm.xlu0 %887, %v834
    %v889 = vpop.permute.xlu0 %888
    %892 = vset.pattern.permute.xlu0 0
    %893 = vperm.xlu0 %892, %v835
    %v894 = vpop.permute.xlu0 %893
    %897 = vset.pattern.permute.xlu0 0
    %898 = vperm.xlu0 %897, %v836
    %v899 = vpop.permute.xlu0 %898
    %902 = vset.pattern.permute.xlu0 0
    %903 = vperm.xlu0 %902, %v837
    %v904 = vpop.permute.xlu0 %903
    %907 = vset.pattern.permute.xlu0 0
    %908 = vperm.xlu0 %907, %v838
    %v909 = vpop.permute.xlu0 %908
    %912 = vset.pattern.permute.xlu0 0
    %913 = vperm.xlu0 %912, %v839
    %v914 = vpop.permute.xlu0 %913
    %917 = vset.pattern.permute.xlu0 0
    %918 = vperm.xlu0 %917, %v840
    %v919 = vpop.permute.xlu0 %918
    %v921 = vmul.f32 %v809, %v844
    %v922 = vmul.f32 %v810, %v849
    %v923 = vmul.f32 %v811, %v854
    %v924 = vmul.f32 %v812, %v859
    %v925 = vmul.f32 %v813, %v864
    %v926 = vmul.f32 %v814, %v869
    %v927 = vmul.f32 %v815, %v874
    %v928 = vmul.f32 %v816, %v879
    %v929 = vmul.f32 %v817, %v884
    %v930 = vmul.f32 %v818, %v889
    %v931 = vmul.f32 %v819, %v894
    %v932 = vmul.f32 %v820, %v899
    %v933 = vmul.f32 %v821, %v904
    %v934 = vmul.f32 %v822, %v909
    %v935 = vmul.f32 %v823, %v914
    %v936 = vmul.f32 %v824, %v919
    %v937 = vadd.f32 %v921, %v922
    %v938 = vadd.f32 %v937, %v923
    %v939 = vadd.f32 %v938, %v924
    %v940 = vadd.f32 %v939, %v925
    %v941 = vadd.f32 %v940, %v926
    %v942 = vadd.f32 %v941, %v927
    %v943 = vadd.f32 %v942, %v928
    %v944 = vadd.f32 %v943, %v929
    %v945 = vadd.f32 %v944, %v930
    %v946 = vadd.f32 %v945, %v931
    %v947 = vadd.f32 %v946, %v932
    %v948 = vadd.f32 %v947, %v933
    %v949 = vadd.f32 %v948, %v934
    %v950 = vadd.f32 %v949, %v935
    %v951 = vadd.f32 %v950, %v936
    %v952 = vrot.slane %v951, 4
    %v953 = vadd.f32 %v951, %v952
    %v954 = vrot.slane %v953, 2
    %v955 = vadd.f32 %v953, %v954
    %v956 = vrot.slane %v955, 1
    %v957 = vadd.f32 %v955, %v956
    %958 = vst [vmem:[#allocation5] sm:$0x1] %v957
    // Predicated region
    $region26: #{tpu_custom_call.1} parent=1 // pred_check
      _
    $region27: #{tpu_custom_call.1} parent=1 // pred_check_branch
      %960 = sbr.rel (0) target = $region29
    $region28: #{tpu_custom_call.1} parent=1 // pred_region
      %s962 = ssub.s32 16, 16
      %963 = vsyncadd [#allocation4], %s962
      %s965 = sshll.u32 [#allocation5], 4
      %s966 = int_to_ptr.vmem [resolvable:$true] %s965
      %968 = dma.vmem_to_hbm [thread:$0]  %s966, 16, %s5, [#allocation4]
    $region29: #{tpu_custom_call.1} parent=1 // pred_fallthru
      _
    // Predicated region
    $region30: #{tpu_custom_call.1} parent=1 // pred_check
      _
    $region31: #{tpu_custom_call.1} parent=1 // pred_check_branch
      %970 = sbr.rel (0) target = $region33
    $region32: #{tpu_custom_call.1} parent=1 // pred_region
      %971 = dma.done [#allocation4], 16
    $region33: #{tpu_custom_call.1} parent=1 // pred_fallthru
      _
    %972 = vsyncpa [#allocation3], 1
    %973 = vsyncpa [#allocation4], 1

</llo_original>
